<compile_context>
chip_gen: v7x
topology: tpu7x:2x2x1
jax: 0.10.0
libtpu: 0.0.40
codegen_flags: <defaults>
</compile_context>

<pallas_src>
import math

import jax
import jax.numpy as jnp
from jax.experimental import pallas as pl
from jax.experimental.pallas import tpu as pltpu

# ---- Model hyperparameters (mirror NER.__init__) ----
WORD_EMB_DIM = 50           # pretrained word-embedding dim (implied by fc1: (50 + O) * 5)
CHAR_EMB_DIM = 32           # chars_embeddings_size
WINDOW_SIZE = 5             # 5 words per example; also Conv1d out_channels
OUT_CHANNELS = WINDOW_SIZE
KERNEL_SIZE = 3
HIDDEN = 100
NUM_CLASSES = 5

LANE = 128                           # TPU lane width
COL = KERNEL_SIZE * CHAR_EMB_DIM     # 96   im2col features per word
K_REAL = WINDOW_SIZE * COL           # 480  packed im2col features (all words)
K_PAD = 512                          # lane-padded im2col K
NPK = WINDOW_SIZE * OUT_CHANNELS     # 25   packed conv output lanes
WF = WINDOW_SIZE * WORD_EMB_DIM      # 250  flattened word-emb features
WF_PAD = 256                         # lane-padded word-emb features
H_PAD = 128                          # lane-padded hidden width


def ner_kernel(x_ref, wf_ref, cw_ref, wa_ref, wb_ref, fb_ref, ow_ref, ob_ref, o_ref):
    T, TB, KP = x_ref.shape                                   # (T, TILE_B, 512)
    # One packed 2-D matmul covers all words / taps / time-steps of this tile.
    x2 = x_ref[...].reshape(T * TB, KP)                       # layout-free: TB % 8 == 0
    conv = jnp.dot(x2, cw_ref[...], preferred_element_type=jnp.float32)   # (T*TB, 128) f32
    # Max-pool over time: elementwise max across the T leading slabs.
    pooled = jnp.max(conv.reshape(T, TB, conv.shape[-1]), axis=0)         # (TB, 128) f32
    # fc1 fused into two matmuls; conv bias already folded into fb_ref.
    h = jnp.dot(wf_ref[...], wa_ref[...], preferred_element_type=jnp.float32)
    h = h + jnp.dot(pooled.astype(wb_ref.dtype), wb_ref[...],
                    preferred_element_type=jnp.float32)
    h = jnp.tanh(h + fb_ref[...])                             # (TB, 128) f32
    # TODO(synk): nn.Dropout(0.3) is inference-mode identity; not implemented.
    out = jnp.dot(h, ow_ref[...], preferred_element_type=jnp.float32) + ob_ref[...]
    o_ref[...] = out.astype(o_ref.dtype)                      # lane-dense (TB, 128)


def _round_up(x, m):
    return (x + m - 1) // m * m


def _cdiv(a, b):
    return -(-a // b)


def _choose_tile_b(B, tile_b_max):
    """Multiple of 8, capped, with >=2 grid steps when the batch allows (v7x 2 TCs)."""
    B8 = _round_up(max(B, 1), 8)
    n_steps = _cdiv(B8, tile_b_max)
    if B8 >= 16:
        n_steps = max(n_steps, 2)
    return max(8, _round_up(_cdiv(B8, n_steps), 8))


def ner_forward(inputs, params, tile_b=256):
    """inputs: (B, 5, 1 + max_word_size) int32; [.., 0] = word id, [.., 1:] = char ids."""
    B = inputs.shape[0]
    L = inputs.shape[2] - 1
    T = L - (KERNEL_SIZE - 1)

    word_ids = inputs[:, :, 0]                          # (B, 5)
    char_ids = inputs[:, :, 1:]                         # (B, 5, L)
    # Embedding gathers (frozen table lookups) are glue; kept in plain JAX.
    # Cast to bf16 right after the gather so the im2col slab is built in bf16.
    word_emb = params['embedding_matrix'][word_ids].astype(jnp.bfloat16)   # (B, 5, 50)
    char_emb = params['char_embedding'][char_ids].astype(jnp.bfloat16)     # (B, 5, L, 32)

    TILE_B = _choose_tile_b(B, tile_b)
    B_pad = _round_up(_round_up(B, 8), TILE_B)
    grid = (B_pad // TILE_B,)

    # Packed im2col: x_wide[t, b, w*96 + k*32 + c] = char_emb[b, w, t+k, c]; 480 -> 512.
    win = jnp.stack([char_emb[:, :, k:k + T, :] for k in range(KERNEL_SIZE)], axis=3)
    win = jnp.transpose(win, (2, 0, 1, 3, 4)).reshape(T, B, K_REAL)         # (T, B, 480)
    x_wide = jnp.pad(win, ((0, 0), (0, B_pad - B), (0, K_PAD - K_REAL)))    # (T, B_pad, 512)

    # Word embeddings flattened; lane-padded 250 -> 256 (bf16).
    word_flat = word_emb.reshape(B, WF)
    word_flat = jnp.pad(word_flat, ((0, B_pad - B), (0, WF_PAD - WF)))      # (B_pad, 256)

    # Packed conv weight: input feature w*96 + k*32 + c -> output lane w*5 + o.
    cw_small = jnp.transpose(params['conv_w'], (2, 1, 0)).reshape(COL, OUT_CHANNELS)  # (96, 5)
    cw_packed = jnp.kron(jnp.eye(WINDOW_SIZE, dtype=jnp.float32), cw_small)           # (480, 25)
    cw_packed = jnp.pad(cw_packed, ((0, K_PAD - K_REAL), (0, LANE - NPK)))             # (512, 128)

    # fc1 weight split into word-emb / pooled slabs.  PyTorch flatten order is
    # per-window [word_emb(50) || pooled(5)], i.e. fc1_w.reshape(H, 5, 55).
    fc1_w3 = params['fc1_w'].reshape(HIDDEN, WINDOW_SIZE, WORD_EMB_DIM + OUT_CHANNELS)
    wa = jnp.transpose(fc1_w3[:, :, :WORD_EMB_DIM], (1, 2, 0)).reshape(WF, HIDDEN)
    wa = jnp.pad(wa, ((0, WF_PAD - WF), (0, H_PAD - HIDDEN)))                          # (256, 128)
    wb = jnp.transpose(fc1_w3[:, :, WORD_EMB_DIM:], (1, 2, 0)).reshape(NPK, HIDDEN)    # (25, 100)
    wb_packed = jnp.pad(wb, ((0, LANE - NPK), (0, H_PAD - HIDDEN)))                    # (128, 128)

    # Fold the conv bias into the fc1 bias (in f32): max_t(conv_t + b) = max_t(conv_t) + b,
    # and (pooled + b_pk) @ wb = pooled @ wb + b_pk @ wb.  Padded lanes have zero weight rows.
    conv_b_packed = jnp.pad(jnp.tile(params['conv_b'], WINDOW_SIZE),
                            (0, LANE - NPK)).reshape(1, LANE)                          # (1, 128)
    fc1_b_eff = (jnp.pad(params['fc1_b'], (0, H_PAD - HIDDEN)).reshape(1, H_PAD)
                 + conv_b_packed @ wb_packed)                                          # (1, 128) f32

    out_w_pad = jnp.pad(params['out_w'].T,
                        ((0, H_PAD - HIDDEN), (0, LANE - NUM_CLASSES)))                # (128, 128) f32
    out_b_pad = jnp.pad(params['out_b'], (0, LANE - NUM_CLASSES)).reshape(1, LANE)

    # bf16 operands for the big matmuls (f32 accumulation inside the kernel).
    cw_packed = cw_packed.astype(jnp.bfloat16)
    wa = wa.astype(jnp.bfloat16)
    wb_bf16 = wb_packed.astype(jnp.bfloat16)

    cost = pl.CostEstimate(
        flops=2 * B_pad * (T * K_PAD * LANE + WF_PAD * H_PAD + LANE * H_PAD + H_PAD * LANE),
        transcendentals=B_pad * H_PAD,
        bytes_accessed=(2 * (x_wide.size + word_flat.size + cw_packed.size
                             + wa.size + wb_bf16.size)
                        + 4 * (fc1_b_eff.size + out_w_pad.size + out_b_pad.size
                               + B_pad * LANE)),
    )

    const = lambda i: (0, 0)
    out = pl.pallas_call(
        ner_kernel,
        out_shape=jax.ShapeDtypeStruct((B_pad, LANE), jnp.float32),
        grid=grid,
        in_specs=[
            pl.BlockSpec((T, TILE_B, K_PAD), lambda i: (0, i, 0)),  # x_wide   (bf16)
            pl.BlockSpec((TILE_B, WF_PAD), lambda i: (i, 0)),       # word_flat (bf16)
            pl.BlockSpec((K_PAD, LANE), const),                     # conv weight (bf16)
            pl.BlockSpec((WF_PAD, H_PAD), const),                   # wa (bf16)
            pl.BlockSpec((LANE, H_PAD), const),                     # wb (bf16)
            pl.BlockSpec((1, H_PAD), const),                        # fc1_b_eff (f32)
            pl.BlockSpec((H_PAD, LANE), const),                     # out_w (f32)
            pl.BlockSpec((1, LANE), const),                         # out_b (f32)
        ],
        out_specs=pl.BlockSpec((TILE_B, LANE), lambda i: (i, 0)),
        compiler_params=pltpu.CompilerParams(
            dimension_semantics=("parallel",),
            vmem_limit_bytes=32 * 1024 * 1024),
        cost_estimate=cost,
    )(x_wide, word_flat, cw_packed, wa, wb_bf16, fc1_b_eff, out_w_pad, out_b_pad)

    return out[:B, :NUM_CLASSES]


def init_params(key, word_vocab_size, char_vocab_size):
    ks = jax.random.split(key, 8)
    emb = 0.1 * jax.random.normal(ks[0], (word_vocab_size, WORD_EMB_DIM), jnp.float32)
    emb = emb.at[0].set(0.0)                            # padding_idx=0
    cemb = jax.random.normal(ks[1], (char_vocab_size, CHAR_EMB_DIM), jnp.float32)
    cemb = cemb.at[0].set(0.0)                          # padding_idx=0
    bc = 1.0 / math.sqrt(CHAR_EMB_DIM * KERNEL_SIZE)
    conv_w = jax.random.uniform(ks[2], (OUT_CHANNELS, CHAR_EMB_DIM, KERNEL_SIZE),
                                jnp.float32, -bc, bc)
    conv_b = jax.random.uniform(ks[3], (OUT_CHANNELS,), jnp.float32, -bc, bc)
    in_f = (WORD_EMB_DIM + OUT_CHANNELS) * WINDOW_SIZE
    l1 = math.sqrt(6.0 / (in_f + HIDDEN))               # xavier_uniform_
    fc1_w = jax.random.uniform(ks[4], (HIDDEN, in_f), jnp.float32, -l1, l1)
    fc1_b = jax.random.uniform(ks[5], (HIDDEN,), jnp.float32,
                               -1.0 / math.sqrt(in_f), 1.0 / math.sqrt(in_f))
    l2 = math.sqrt(6.0 / (HIDDEN + NUM_CLASSES))        # xavier_uniform_
    out_w = jax.random.uniform(ks[6], (NUM_CLASSES, HIDDEN), jnp.float32, -l2, l2)
    out_b = jax.random.uniform(ks[7], (NUM_CLASSES,), jnp.float32,
                               -1.0 / math.sqrt(HIDDEN), 1.0 / math.sqrt(HIDDEN))
    return dict(embedding_matrix=emb, char_embedding=cemb,
                conv_w=conv_w, conv_b=conv_b,
                fc1_w=fc1_w, fc1_b=fc1_b,
                out_w=out_w, out_b=out_b)


def ner_reference(inputs, params):
    """Pure-JAX f32 reference matching the PyTorch forward (inference mode)."""
    B = inputs.shape[0]
    L = inputs.shape[2] - 1
    T = L - (KERNEL_SIZE - 1)
    we = params['embedding_matrix'][inputs[:, :, 0]]              # (B, 5, 50)
    ce = params['char_embedding'][inputs[:, :, 1:]]               # (B, 5, L, 32)
    conv_w, conv_b = params['conv_w'], params['conv_b']
    conv = sum(jnp.einsum('bwtc,oc->bwto', ce[:, :, k:k + T, :], conv_w[:, :, k])
               for k in range(KERNEL_SIZE)) + conv_b[None, None, None, :]
    pooled = conv.max(axis=2)                                     # (B, 5, O)
    flat = jnp.concatenate([we, pooled], axis=-1).reshape(B, -1)  # (B, 275)
    h = jnp.tanh(flat @ params['fc1_w'].T + params['fc1_b'])
    return h @ params['out_w'].T + params['out_b']


if __name__ == "__main__":
    key = jax.random.PRNGKey(0)
    B = 2
    MAX_WORD_SIZE = 8
    WORD_VOCAB = 100
    CHAR_VOCAB = 30

    k_params, k_words, k_chars = jax.random.split(key, 3)
    params = init_params(k_params, WORD_VOCAB, CHAR_VOCAB)

    word_ids = jax.random.randint(k_words, (B, WINDOW_SIZE, 1), 1, WORD_VOCAB)
    char_ids = jax.random.randint(k_chars, (B, WINDOW_SIZE, MAX_WORD_SIZE), 0, CHAR_VOCAB)
    inputs = jnp.concatenate([word_ids, char_ids], axis=-1).astype(jnp.int32)  # (2, 5, 9)

    out = ner_forward(inputs, params)
    out = jax.block_until_ready(out)
    assert out.shape == (B, NUM_CLASSES)

    ref = ner_reference(inputs, params)
    # Tolerance loosened vs. the f32 reference because matmul inputs are bf16
    # (accumulation stays f32 via preferred_element_type).
    if not jnp.allclose(out, ref, atol=2e-2, rtol=2e-2):
        raise AssertionError(f"mismatch vs reference:\n{out}\n{ref}")
    print("KERNEL_OK")
</pallas_src>

<mosaic_0001>
module attributes {stable_mosaic.version = 11 : i64} {
  func.func @ner_kernel(%arg0: i32, %arg1: memref<6x8x512xbf16, #tpu.memory_space<vmem>>, %arg2: memref<8x256xbf16, #tpu.memory_space<vmem>>, %arg3: memref<512x128xbf16, #tpu.memory_space<vmem>>, %arg4: memref<256x128xbf16, #tpu.memory_space<vmem>>, %arg5: memref<128x128xbf16, #tpu.memory_space<vmem>>, %arg6: memref<1x128xf32, #tpu.memory_space<vmem>>, %arg7: memref<128x128xf32, #tpu.memory_space<vmem>>, %arg8: memref<1x128xf32, #tpu.memory_space<vmem>>, %arg9: memref<8x128xf32, #tpu.memory_space<vmem>>) attributes {dimension_semantics = [#tpu.dimension_semantics<parallel>], iteration_bounds = array<i64: 1>, scalar_prefetch = 0 : i64, scratch_operands = 0 : i64, tpu.core_type = #tpu.core_type<tc>, window_params = [{transform_indices = @transform_0, window_bounds = array<i64: 6, 8, 512>}, {transform_indices = @transform_1, window_bounds = array<i64: 8, 256>}, {pipeline_mode = #tpu.pipeline_mode<synchronous>, transform_indices = @transform_2, window_bounds = array<i64: 512, 128>}, {pipeline_mode = #tpu.pipeline_mode<synchronous>, transform_indices = @transform_3, window_bounds = array<i64: 256, 128>}, {pipeline_mode = #tpu.pipeline_mode<synchronous>, transform_indices = @transform_4, window_bounds = array<i64: 128, 128>}, {pipeline_mode = #tpu.pipeline_mode<synchronous>, transform_indices = @transform_5, window_bounds = array<i64: 1, 128>}, {pipeline_mode = #tpu.pipeline_mode<synchronous>, transform_indices = @transform_6, window_bounds = array<i64: 128, 128>}, {pipeline_mode = #tpu.pipeline_mode<synchronous>, transform_indices = @transform_7, window_bounds = array<i64: 1, 128>}, {transform_indices = @transform_8, window_bounds = array<i64: 8, 128>}]} {
    %c0 = arith.constant 0 : index
    %c0_0 = arith.constant 0 : index
    %c0_1 = arith.constant 0 : index
    %0 = vector.load %arg1[%c0, %c0_0, %c0_1] : memref<6x8x512xbf16, #tpu.memory_space<vmem>>, vector<6x8x512xbf16>
    %1 = vector.shape_cast %0 : vector<6x8x512xbf16> to vector<48x512xbf16>
    %c0_2 = arith.constant 0 : index
    %c0_3 = arith.constant 0 : index
    %2 = vector.load %arg3[%c0_2, %c0_3] : memref<512x128xbf16, #tpu.memory_space<vmem>>, vector<512x128xbf16>
    %cst = arith.constant dense<0.000000e+00> : vector<48x128xf32>
    %3 = tpu.matmul %1, %2, %cst {dimension_numbers = #tpu.dot_dimension_numbers<[1], [0], [0], [1], [0, 0, 1, 1], [], []>} : vector<48x512xbf16>, vector<512x128xbf16>, vector<48x128xf32> -> vector<48x128xf32>
    %4 = vector.shape_cast %3 : vector<48x128xf32> to vector<6x8x128xf32>
    %cst_4 = arith.constant dense<0xFF800000> : vector<8x128xf32>
    %5 = vector.multi_reduction <maximumf>, %4, %cst_4 [0] : vector<6x8x128xf32> to vector<8x128xf32>
    %c0_5 = arith.constant 0 : index
    %c0_6 = arith.constant 0 : index
    %6 = vector.load %arg2[%c0_5, %c0_6] : memref<8x256xbf16, #tpu.memory_space<vmem>>, vector<8x256xbf16>
    %c0_7 = arith.constant 0 : index
    %c0_8 = arith.constant 0 : index
    %7 = vector.load %arg4[%c0_7, %c0_8] : memref<256x128xbf16, #tpu.memory_space<vmem>>, vector<256x128xbf16>
    %cst_9 = arith.constant dense<0.000000e+00> : vector<8x128xf32>
    %8 = tpu.matmul %6, %7, %cst_9 {dimension_numbers = #tpu.dot_dimension_numbers<[1], [0], [0], [1], [0, 0, 1, 1], [], []>} : vector<8x256xbf16>, vector<256x128xbf16>, vector<8x128xf32> -> vector<8x128xf32>
    %9 = arith.truncf %5 : vector<8x128xf32> to vector<8x128xbf16>
    %c0_10 = arith.constant 0 : index
    %c0_11 = arith.constant 0 : index
    %10 = vector.load %arg5[%c0_10, %c0_11] : memref<128x128xbf16, #tpu.memory_space<vmem>>, vector<128x128xbf16>
    %cst_12 = arith.constant dense<0.000000e+00> : vector<8x128xf32>
    %11 = tpu.matmul %9, %10, %cst_12 {dimension_numbers = #tpu.dot_dimension_numbers<[1], [0], [0], [1], [0, 0, 1, 1], [], []>} : vector<8x128xbf16>, vector<128x128xbf16>, vector<8x128xf32> -> vector<8x128xf32>
    %12 = arith.addf %8, %11 : vector<8x128xf32>
    %c0_13 = arith.constant 0 : index
    %c0_14 = arith.constant 0 : index
    %13 = vector.load %arg6[%c0_13, %c0_14] : memref<1x128xf32, #tpu.memory_space<vmem>>, vector<1x128xf32>
    %14 = vector.broadcast %13 : vector<1x128xf32> to vector<8x128xf32>
    %15 = arith.addf %12, %14 : vector<8x128xf32>
    %16 = math.tanh %15 : vector<8x128xf32>
    %c0_15 = arith.constant 0 : index
    %c0_16 = arith.constant 0 : index
    %17 = vector.load %arg7[%c0_15, %c0_16] : memref<128x128xf32, #tpu.memory_space<vmem>>, vector<128x128xf32>
    %cst_17 = arith.constant dense<0.000000e+00> : vector<8x128xf32>
    %18 = tpu.matmul %16, %17, %cst_17 {dimension_numbers = #tpu.dot_dimension_numbers<[1], [0], [0], [1], [0, 0, 1, 1], [], []>} : vector<8x128xf32>, vector<128x128xf32>, vector<8x128xf32> -> vector<8x128xf32>
    %c0_18 = arith.constant 0 : index
    %c0_19 = arith.constant 0 : index
    %19 = vector.load %arg8[%c0_18, %c0_19] : memref<1x128xf32, #tpu.memory_space<vmem>>, vector<1x128xf32>
    %20 = vector.broadcast %19 : vector<1x128xf32> to vector<8x128xf32>
    %21 = arith.addf %18, %20 : vector<8x128xf32>
    %c0_20 = arith.constant 0 : index
    %c0_21 = arith.constant 0 : index
    %22 = vector.load %arg9[%c0_20, %c0_21] : memref<8x128xf32, #tpu.memory_space<vmem>>, vector<8x128xf32>
    tpu.vector_store %arg9[%c0_20, %c0_21], %21 {strides = array<i32>} : memref<8x128xf32, #tpu.memory_space<vmem>>, vector<8x128xf32>,
    return
  }
  func.func @transform_0(%arg0: i32) -> (i32, i32, i32) {
    %c0_i32 = arith.constant 0 : i32
    %c0_i32_0 = arith.constant 0 : i32
    %c0_i32_1 = arith.constant 0 : i32
    return %c0_i32, %arg0, %c0_i32_0 : i32, i32, i32
  }
  func.func @transform_1(%arg0: i32) -> (i32, i32) {
    %c0_i32 = arith.constant 0 : i32
    %c0_i32_0 = arith.constant 0 : i32
    return %arg0, %c0_i32 : i32, i32
  }
  func.func @transform_2(%arg0: i32) -> (i32, i32) {
    %c0_i32 = arith.constant 0 : i32
    %c0_i32_0 = arith.constant 0 : i32
    %c0_i32_1 = arith.constant 0 : i32
    return %c0_i32, %c0_i32_0 : i32, i32
  }
  func.func @transform_3(%arg0: i32) -> (i32, i32) {
    %c0_i32 = arith.constant 0 : i32
    %c0_i32_0 = arith.constant 0 : i32
    %c0_i32_1 = arith.constant 0 : i32
    return %c0_i32, %c0_i32_0 : i32, i32
  }
  func.func @transform_4(%arg0: i32) -> (i32, i32) {
    %c0_i32 = arith.constant 0 : i32
    %c0_i32_0 = arith.constant 0 : i32
    %c0_i32_1 = arith.constant 0 : i32
    return %c0_i32, %c0_i32_0 : i32, i32
  }
  func.func @transform_5(%arg0: i32) -> (i32, i32) {
    %c0_i32 = arith.constant 0 : i32
    %c0_i32_0 = arith.constant 0 : i32
    %c0_i32_1 = arith.constant 0 : i32
    return %c0_i32, %c0_i32_0 : i32, i32
  }
  func.func @transform_6(%arg0: i32) -> (i32, i32) {
    %c0_i32 = arith.constant 0 : i32
    %c0_i32_0 = arith.constant 0 : i32
    %c0_i32_1 = arith.constant 0 : i32
    return %c0_i32, %c0_i32_0 : i32, i32
  }
  func.func @transform_7(%arg0: i32) -> (i32, i32) {
    %c0_i32 = arith.constant 0 : i32
    %c0_i32_0 = arith.constant 0 : i32
    %c0_i32_1 = arith.constant 0 : i32
    return %c0_i32, %c0_i32_0 : i32, i32
  }
  func.func @transform_8(%arg0: i32) -> (i32, i32) {
    %c0_i32 = arith.constant 0 : i32
    %c0_i32_0 = arith.constant 0 : i32
    return %arg0, %c0_i32 : i32, i32
  }
}

</mosaic_0001>

<llo_original>
// kernel: tpu_custom_call.1
$region0: #{tpu_custom_call.1}
  #allocation0 [shape = 'u32[]', space=smem, size = 0x4, offset = 0x4, fixed_abs, tag = 'smem constant byte address 0x4 - core index']
  #allocation1 [shape = 'u32[144,128]{1,0:T(1,128)}', space=vmem, size = 0x12000, scoped, tag = 'internal scratch']
  %s0 = inlined_call_operand.hbm [shape: bf16[6,8,512], index: 0, kind: input, shape index: {}]
  %s1 = inlined_call_operand.hbm [shape: bf16[8,256], index: 1, kind: input, shape index: {}]
  %s2 = inlined_call_operand.hbm [shape: bf16[512,128], index: 2, kind: input, shape index: {}]
  %s3 = inlined_call_operand.hbm [shape: bf16[256,128], index: 3, kind: input, shape index: {}]
  %s4 = inlined_call_operand.hbm [shape: bf16[128,128], index: 4, kind: input, shape index: {}]
  %s5 = inlined_call_operand.vmem [shape: f32[1,128], index: 5, kind: input, shape index: {}]
  %s6 = inlined_call_operand.hbm [shape: f32[128,128], index: 6, kind: input, shape index: {}]
  %s7 = inlined_call_operand.vmem [shape: f32[1,128], index: 7, kind: input, shape index: {}]
  %s8 = inlined_call_operand.hbm [shape: f32[8,128], index: 8, kind: output, shape index: {}]
  %s9 = sld [smem:[#allocation0]]
  $region66: #{tpu_custom_call.1} parent=0
    _
  %s11 = ssub.s32 1, %s9
  %s12 = scalar_select 0, %s11, %s9
  $region1: #{tpu_custom_call.1} parent=0
    #allocation2 [shape = 'u8[49152]{0}', space=vmem, size = 0xc000, scoped, tag = 'input window, operand 0, single buffered']
    #allocation3 [shape = 's32[1]{0}', space=sflag, size = 0x4, scoped, tag = 'scoped memory for tpu_custom_call.1']
    #allocation4 [shape = 's32[1]{0}', space=sflag, size = 0x4, scoped, tag = 'scoped memory for tpu_custom_call.1']
    #allocation5 [shape = 'u8[4096]{0}', space=vmem, size = 0x1000, scoped, tag = 'input window, operand 1, single buffered']
    #allocation6 [shape = 's32[1]{0}', space=sflag, size = 0x4, scoped, tag = 'scoped memory for tpu_custom_call.1']
    #allocation7 [shape = 'u8[131072]{0}', space=vmem, size = 0x20000, scoped, tag = 'input window, operand 2, single buffered']
    #allocation8 [shape = 'u8[65536]{0}', space=vmem, size = 0x10000, scoped, tag = 'input window, operand 3, single buffered']
    #allocation9 [shape = 's32[1]{0}', space=sflag, size = 0x4, scoped, tag = 'scoped memory for tpu_custom_call.1']
    #allocation10 [shape = 'u8[32768]{0}', space=vmem, size = 0x8000, scoped, tag = 'input window, operand 4, single buffered']
    #allocation11 [shape = 'u8[65536]{0}', space=vmem, size = 0x10000, scoped, tag = 'input window, operand 6, single buffered']
    #allocation12 [shape = 's32[1]{0}', space=sflag, size = 0x4, scoped, tag = 'scoped memory for tpu_custom_call.1']
    #allocation13 [shape = 'u8[4096]{0}', space=vmem, size = 0x1000, scoped, tag = 'output window, operand 0, single buffered']
    %13 = vsyncpa [#allocation3], 0
    %14 = vsyncpa [#allocation6], 0
    %15 = vsyncpa [#allocation9], 0
    %16 = vsyncpa [#allocation12], 0
    %17 = vsyncpa [#allocation4], 0
    // Predicated region
    $region2: #{tpu_custom_call.1} parent=1 // pred_check
      _
    $region3: #{tpu_custom_call.1} parent=1 // pred_check_branch
      %19 = sbr.rel (0) target = $region5
    $region4: #{tpu_custom_call.1} parent=1 // pred_region
      %s21 = ssub.s32 1536, 1536
      %22 = vsyncadd [#allocation3], %s21
      %s23 = sshll.u32 [#allocation2], 4
      %s24 = int_to_ptr.vmem [resolvable:$true] %s23
      %29 = dma.hbm_to_vmem [thread:$0]  %s0, 1536, %s24, [#allocation3], 256, 256, 16
    $region5: #{tpu_custom_call.1} parent=1 // pred_fallthru
      _
    // Predicated region
    $region6: #{tpu_custom_call.1} parent=1 // pred_check
      _
    $region7: #{tpu_custom_call.1} parent=1 // pred_check_branch
      %31 = sbr.rel (0) target = $region9
    $region8: #{tpu_custom_call.1} parent=1 // pred_region
      %s33 = ssub.s32 128, 128
      %34 = vsyncadd [#allocation6], %s33
      %s36 = sshll.u32 [#allocation5], 4
      %s37 = int_to_ptr.vmem [resolvable:$true] %s36
      %39 = dma.hbm_to_vmem [thread:$0]  %s1, 128, %s37, [#allocation6]
    $region9: #{tpu_custom_call.1} parent=1 // pred_fallthru
      _
    // Predicated region
    $region10: #{tpu_custom_call.1} parent=1 // pred_check
      _
    $region11: #{tpu_custom_call.1} parent=1 // pred_check_branch
      %41 = sbr.rel (0) target = $region13
    $region12: #{tpu_custom_call.1} parent=1 // pred_region
      %s43 = ssub.s32 4096, 4096
      %44 = vsyncadd [#allocation6], %s43
      %s45 = sshll.u32 [#allocation7], 4
      %s46 = int_to_ptr.vmem [resolvable:$true] %s45
      %51 = dma.hbm_to_vmem [thread:$0]  %s2, 4096, %s46, [#allocation6], 64, 64, 4
    $region13: #{tpu_custom_call.1} parent=1 // pred_fallthru
      _
    // Predicated region
    $region14: #{tpu_custom_call.1} parent=1 // pred_check
      _
    $region15: #{tpu_custom_call.1} parent=1 // pred_check_branch
      %53 = sbr.rel (0) target = $region17
    $region16: #{tpu_custom_call.1} parent=1 // pred_region
      %s55 = ssub.s32 2048, 2048
      %56 = vsyncadd [#allocation9], %s55
      %s57 = sshll.u32 [#allocation8], 4
      %s58 = int_to_ptr.vmem [resolvable:$true] %s57
      %63 = dma.hbm_to_vmem [thread:$0]  %s3, 2048, %s58, [#allocation9], 64, 64, 4
    $region17: #{tpu_custom_call.1} parent=1 // pred_fallthru
      _
    // Predicated region
    $region18: #{tpu_custom_call.1} parent=1 // pred_check
      _
    $region19: #{tpu_custom_call.1} parent=1 // pred_check_branch
      %65 = sbr.rel (0) target = $region21
    $region20: #{tpu_custom_call.1} parent=1 // pred_region
      %s67 = ssub.s32 1024, 1024
      %68 = vsyncadd [#allocation9], %s67
      %s69 = sshll.u32 [#allocation10], 4
      %s70 = int_to_ptr.vmem [resolvable:$true] %s69
      %75 = dma.hbm_to_vmem [thread:$0]  %s4, 1024, %s70, [#allocation9], 64, 64, 4
    $region21: #{tpu_custom_call.1} parent=1 // pred_fallthru
      _
    // Predicated region
    $region22: #{tpu_custom_call.1} parent=1 // pred_check
      _
    $region23: #{tpu_custom_call.1} parent=1 // pred_check_branch
      %77 = sbr.rel (0) target = $region25
    $region24: #{tpu_custom_call.1} parent=1 // pred_region
      _
    $region25: #{tpu_custom_call.1} parent=1 // pred_fallthru
      _
    // Predicated region
    $region26: #{tpu_custom_call.1} parent=1 // pred_check
      _
    $region27: #{tpu_custom_call.1} parent=1 // pred_check_branch
      %79 = sbr.rel (0) target = $region29
    $region28: #{tpu_custom_call.1} parent=1 // pred_region
      %s81 = ssub.s32 2048, 2048
      %82 = vsyncadd [#allocation12], %s81
      %s83 = sshll.u32 [#allocation11], 4
      %s84 = int_to_ptr.vmem [resolvable:$true] %s83
      %89 = dma.hbm_to_vmem [thread:$0]  %s6, 2048, %s84, [#allocation12], 128, 128, 8
    $region29: #{tpu_custom_call.1} parent=1 // pred_fallthru
      _
    // Predicated region
    $region30: #{tpu_custom_call.1} parent=1 // pred_check
      _
    $region31: #{tpu_custom_call.1} parent=1 // pred_check_branch
      %91 = sbr.rel (0) target = $region33
    $region32: #{tpu_custom_call.1} parent=1 // pred_region
      _
    $region33: #{tpu_custom_call.1} parent=1 // pred_fallthru
      _
    // Predicated region
    $region34: #{tpu_custom_call.1} parent=1 // pred_check
      _
    $region35: #{tpu_custom_call.1} parent=1 // pred_check_branch
      %93 = sbr.rel (0) target = $region37
    $region36: #{tpu_custom_call.1} parent=1 // pred_region
      %94 = dma.done [#allocation3], 1536
    $region37: #{tpu_custom_call.1} parent=1 // pred_fallthru
      _
    // Predicated region
    $region38: #{tpu_custom_call.1} parent=1 // pred_check
      _
    $region39: #{tpu_custom_call.1} parent=1 // pred_check_branch
      %96 = sbr.rel (0) target = $region41
    $region40: #{tpu_custom_call.1} parent=1 // pred_region
      %97 = dma.done [#allocation6], 128
    $region41: #{tpu_custom_call.1} parent=1 // pred_fallthru
      _
    // Predicated region
    $region42: #{tpu_custom_call.1} parent=1 // pred_check
      _
    $region43: #{tpu_custom_call.1} parent=1 // pred_check_branch
      %99 = sbr.rel (0) target = $region45
    $region44: #{tpu_custom_call.1} parent=1 // pred_region
      %100 = dma.done [#allocation6], 4096
    $region45: #{tpu_custom_call.1} parent=1 // pred_fallthru
      _
    // Predicated region
    $region46: #{tpu_custom_call.1} parent=1 // pred_check
      _
    $region47: #{tpu_custom_call.1} parent=1 // pred_check_branch
      %102 = sbr.rel (0) target = $region49
    $region48: #{tpu_custom_call.1} parent=1 // pred_region
      %103 = dma.done [#allocation9], 2048
    $region49: #{tpu_custom_call.1} parent=1 // pred_fallthru
      _
    // Predicated region
    $region50: #{tpu_custom_call.1} parent=1 // pred_check
      _
    $region51: #{tpu_custom_call.1} parent=1 // pred_check_branch
      %105 = sbr.rel (0) target = $region53
    $region52: #{tpu_custom_call.1} parent=1 // pred_region
      %106 = dma.done [#allocation9], 1024
    $region53: #{tpu_custom_call.1} parent=1 // pred_fallthru
      _
    // Predicated region
    $region54: #{tpu_custom_call.1} parent=1 // pred_check
      _
    $region55: #{tpu_custom_call.1} parent=1 // pred_check_branch
      %108 = sbr.rel (0) target = $region57
    $region56: #{tpu_custom_call.1} parent=1 // pred_region
      %109 = dma.done [#allocation12], 2048
    $region57: #{tpu_custom_call.1} parent=1 // pred_fallthru
      _
    %v111 = vld [vmem:[#allocation2] sm:$0xff]
    %v112 = vld [vmem:[#allocation2 + $0x8] sm:$0xff]
    %v113 = vld [vmem:[#allocation2 + $0x10] sm:$0xff]
    %v114 = vld [vmem:[#allocation2 + $0x18] sm:$0xff]
    %v115 = vld [vmem:[#allocation2 + $0x20] sm:$0xff]
    %v116 = vld [vmem:[#allocation2 + $0x28] sm:$0xff]
    %v117 = vld [vmem:[#allocation2 + $0x30] sm:$0xff]
    %v118 = vld [vmem:[#allocation2 + $0x38] sm:$0xff]
    %v119 = vld [vmem:[#allocation2 + $0x40] sm:$0xff]
    %v120 = vld [vmem:[#allocation2 + $0x48] sm:$0xff]
    %v121 = vld [vmem:[#allocation2 + $0x50] sm:$0xff]
    %v122 = vld [vmem:[#allocation2 + $0x58] sm:$0xff]
    %v123 = vld [vmem:[#allocation7] sm:$0xf]
    %v124 = vld [vmem:[#allocation7 + $0x4] sm:$0xf]
    %v125 = vld [vmem:[#allocation7 + $0x8] sm:$0xf]
    %v126 = vld [vmem:[#allocation7 + $0xc] sm:$0xf]
    %v127 = vld [vmem:[#allocation7 + $0x10] sm:$0xf]
    %v128 = vld [vmem:[#allocation7 + $0x14] sm:$0xf]
    %v129 = vld [vmem:[#allocation7 + $0x18] sm:$0xf]
    %v130 = vld [vmem:[#allocation7 + $0x1c] sm:$0xf]
    %v131 = vld [vmem:[#allocation7 + $0x20] sm:$0xf]
    %v132 = vld [vmem:[#allocation7 + $0x24] sm:$0xf]
    %v133 = vld [vmem:[#allocation7 + $0x28] sm:$0xf]
    %v134 = vld [vmem:[#allocation7 + $0x2c] sm:$0xf]
    %v135 = vld [vmem:[#allocation7 + $0x30] sm:$0xf]
    %v136 = vld [vmem:[#allocation7 + $0x34] sm:$0xf]
    %v137 = vld [vmem:[#allocation7 + $0x38] sm:$0xf]
    %v138 = vld [vmem:[#allocation7 + $0x3c] sm:$0xf]
    %v139 = vld [vmem:[#allocation7 + $0x40] sm:$0xf]
    %v140 = vld [vmem:[#allocation7 + $0x44] sm:$0xf]
    %v141 = vld [vmem:[#allocation7 + $0x48] sm:$0xf]
    %v142 = vld [vmem:[#allocation7 + $0x4c] sm:$0xf]
    %v143 = vld [vmem:[#allocation7 + $0x50] sm:$0xf]
    %v144 = vld [vmem:[#allocation7 + $0x54] sm:$0xf]
    %v145 = vld [vmem:[#allocation7 + $0x58] sm:$0xf]
    %v146 = vld [vmem:[#allocation7 + $0x5c] sm:$0xf]
    %v147 = vld [vmem:[#allocation7 + $0x60] sm:$0xf]
    %v148 = vld [vmem:[#allocation7 + $0x64] sm:$0xf]
    %v149 = vld [vmem:[#allocation7 + $0x68] sm:$0xf]
    %v150 = vld [vmem:[#allocation7 + $0x6c] sm:$0xf]
    %v151 = vld [vmem:[#allocation7 + $0x70] sm:$0xf]
    %v152 = vld [vmem:[#allocation7 + $0x74] sm:$0xf]
    %v153 = vld [vmem:[#allocation7 + $0x78] sm:$0xf]
    %v154 = vld [vmem:[#allocation7 + $0x7c] sm:$0xf]
    %v155 = vld [vmem:[#allocation7 + $0x80] sm:$0xf]
    %v156 = vld [vmem:[#allocation7 + $0x84] sm:$0xf]
    %v157 = vld [vmem:[#allocation7 + $0x88] sm:$0xf]
    %v158 = vld [vmem:[#allocation7 + $0x8c] sm:$0xf]
    %v159 = vld [vmem:[#allocation7 + $0x90] sm:$0xf]
    %v160 = vld [vmem:[#allocation7 + $0x94] sm:$0xf]
    %v161 = vld [vmem:[#allocation7 + $0x98] sm:$0xf]
    %v162 = vld [vmem:[#allocation7 + $0x9c] sm:$0xf]
    %v163 = vld [vmem:[#allocation7 + $0xa0] sm:$0xf]
    %v164 = vld [vmem:[#allocation7 + $0xa4] sm:$0xf]
    %v165 = vld [vmem:[#allocation7 + $0xa8] sm:$0xf]
    %v166 = vld [vmem:[#allocation7 + $0xac] sm:$0xf]
    %v167 = vld [vmem:[#allocation7 + $0xb0] sm:$0xf]
    %v168 = vld [vmem:[#allocation7 + $0xb4] sm:$0xf]
    %v169 = vld [vmem:[#allocation7 + $0xb8] sm:$0xf]
    %v170 = vld [vmem:[#allocation7 + $0xbc] sm:$0xf]
    %v171 = vld [vmem:[#allocation7 + $0xc0] sm:$0xf]
    %v172 = vld [vmem:[#allocation7 + $0xc4] sm:$0xf]
    %v173 = vld [vmem:[#allocation7 + $0xc8] sm:$0xf]
    %v174 = vld [vmem:[#allocation7 + $0xcc] sm:$0xf]
    %v175 = vld [vmem:[#allocation7 + $0xd0] sm:$0xf]
    %v176 = vld [vmem:[#allocation7 + $0xd4] sm:$0xf]
    %v177 = vld [vmem:[#allocation7 + $0xd8] sm:$0xf]
    %v178 = vld [vmem:[#allocation7 + $0xdc] sm:$0xf]
    %v179 = vld [vmem:[#allocation7 + $0xe0] sm:$0xf]
    %v180 = vld [vmem:[#allocation7 + $0xe4] sm:$0xf]
    %v181 = vld [vmem:[#allocation7 + $0xe8] sm:$0xf]
    %v182 = vld [vmem:[#allocation7 + $0xec] sm:$0xf]
    %v183 = vld [vmem:[#allocation7 + $0xf0] sm:$0xf]
    %v184 = vld [vmem:[#allocation7 + $0xf4] sm:$0xf]
    %v185 = vld [vmem:[#allocation7 + $0xf8] sm:$0xf]
    %v186 = vld [vmem:[#allocation7 + $0xfc] sm:$0xf]
    %v199 = vunpack.c.l.b16 %v111
    %v200 = vunpack.c.h.b16 %v111
    %v201 = vunpack.c.l.b16 %v112
    %v202 = vunpack.c.h.b16 %v112
    %v203 = vunpack.c.l.b16 %v113
    %v204 = vunpack.c.h.b16 %v113
    %v205 = vunpack.c.l.b16 %v114
    %v206 = vunpack.c.h.b16 %v114
    %v207 = vunpack.c.l.b16 %v115
    %v208 = vunpack.c.h.b16 %v115
    %v209 = vunpack.c.l.b16 %v116
    %v210 = vunpack.c.h.b16 %v116
    %v211 = vunpack.c.l.b16 %v117
    %v212 = vunpack.c.h.b16 %v117
    %v213 = vunpack.c.l.b16 %v118
    %v214 = vunpack.c.h.b16 %v118
    %v215 = vunpack.c.l.b16 %v119
    %v216 = vunpack.c.h.b16 %v119
    %v217 = vunpack.c.l.b16 %v120
    %v218 = vunpack.c.h.b16 %v120
    %v219 = vunpack.c.l.b16 %v121
    %v220 = vunpack.c.h.b16 %v121
    %v221 = vunpack.c.l.b16 %v122
    %v222 = vunpack.c.h.b16 %v122
    %v223 = vpack.c.b16 %v203, %v199
    %v224 = vpack.c.b16 %v204, %v200
    %v225 = vpack.c.b16 %v205, %v201
    %v226 = vpack.c.b16 %v206, %v202
    %v227 = vpack.c.b16 %v211, %v207
    %v228 = vpack.c.b16 %v212, %v208
    %v229 = vpack.c.b16 %v213, %v209
    %v230 = vpack.c.b16 %v214, %v210
    %v231 = vpack.c.b16 %v219, %v215
    %v232 = vpack.c.b16 %v220, %v216
    %v233 = vpack.c.b16 %v221, %v217
    %v234 = vpack.c.b16 %v222, %v218
    %v311 = vunpack.c.l.b16 %v123
    %v312 = vunpack.c.l.b16 %v124
    %v313 = vunpack.c.l.b16 %v125
    %v314 = vunpack.c.l.b16 %v126
    %v315 = vunpack.c.l.b16 %v127
    %v316 = vunpack.c.l.b16 %v128
    %v317 = vunpack.c.l.b16 %v129
    %v318 = vunpack.c.l.b16 %v130
    %v319 = vunpack.c.l.b16 %v131
    %v320 = vunpack.c.l.b16 %v132
    %v321 = vunpack.c.l.b16 %v133
    %v322 = vunpack.c.l.b16 %v134
    %v323 = vunpack.c.l.b16 %v135
    %v324 = vunpack.c.l.b16 %v136
    %v325 = vunpack.c.l.b16 %v137
    %v326 = vunpack.c.l.b16 %v138
    %v327 = vunpack.c.l.b16 %v139
    %v328 = vunpack.c.l.b16 %v140
    %v329 = vunpack.c.l.b16 %v141
    %v330 = vunpack.c.l.b16 %v142
    %v331 = vunpack.c.l.b16 %v143
    %v332 = vunpack.c.l.b16 %v144
    %v333 = vunpack.c.l.b16 %v145
    %v334 = vunpack.c.l.b16 %v146
    %v335 = vunpack.c.l.b16 %v147
    %v336 = vunpack.c.l.b16 %v148
    %v337 = vunpack.c.l.b16 %v149
    %v338 = vunpack.c.l.b16 %v150
    %v339 = vunpack.c.l.b16 %v151
    %v340 = vunpack.c.l.b16 %v152
    %v341 = vunpack.c.l.b16 %v153
    %v342 = vunpack.c.l.b16 %v154
    %v343 = vunpack.c.l.b16 %v155
    %v344 = vunpack.c.l.b16 %v156
    %v345 = vunpack.c.l.b16 %v157
    %v346 = vunpack.c.l.b16 %v158
    %v347 = vunpack.c.l.b16 %v159
    %v348 = vunpack.c.l.b16 %v160
    %v349 = vunpack.c.l.b16 %v161
    %v350 = vunpack.c.l.b16 %v162
    %v351 = vunpack.c.l.b16 %v163
    %v352 = vunpack.c.l.b16 %v164
    %v353 = vunpack.c.l.b16 %v165
    %v354 = vunpack.c.l.b16 %v166
    %v355 = vunpack.c.l.b16 %v167
    %v356 = vunpack.c.l.b16 %v168
    %v357 = vunpack.c.l.b16 %v169
    %v358 = vunpack.c.l.b16 %v170
    %v359 = vunpack.c.l.b16 %v171
    %v360 = vunpack.c.l.b16 %v172
    %v361 = vunpack.c.l.b16 %v173
    %v362 = vunpack.c.l.b16 %v174
    %v363 = vunpack.c.l.b16 %v175
    %v364 = vunpack.c.l.b16 %v176
    %v365 = vunpack.c.l.b16 %v177
    %v366 = vunpack.c.l.b16 %v178
    %v367 = vunpack.c.l.b16 %v179
    %v368 = vunpack.c.l.b16 %v180
    %v369 = vunpack.c.l.b16 %v181
    %v370 = vunpack.c.l.b16 %v182
    %v371 = vunpack.c.l.b16 %v183
    %v372 = vunpack.c.l.b16 %v184
    %v373 = vunpack.c.l.b16 %v185
    %v374 = vunpack.c.l.b16 %v186
    %v375 = vpack.c.b16 %v312, %v311
    %v376 = vpack.c.b16 %v314, %v313
    %v377 = vpack.c.b16 %v316, %v315
    %v378 = vpack.c.b16 %v318, %v317
    %v379 = vpack.c.b16 %v320, %v319
    %v380 = vpack.c.b16 %v322, %v321
    %v381 = vpack.c.b16 %v324, %v323
    %v382 = vpack.c.b16 %v326, %v325
    %v383 = vpack.c.b16 %v328, %v327
    %v384 = vpack.c.b16 %v330, %v329
    %v385 = vpack.c.b16 %v332, %v331
    %v386 = vpack.c.b16 %v334, %v333
    %v387 = vpack.c.b16 %v336, %v335
    %v388 = vpack.c.b16 %v338, %v337
    %v389 = vpack.c.b16 %v340, %v339
    %v390 = vpack.c.b16 %v342, %v341
    %v391 = vpack.c.b16 %v344, %v343
    %v392 = vpack.c.b16 %v346, %v345
    %v393 = vpack.c.b16 %v348, %v347
    %v394 = vpack.c.b16 %v350, %v349
    %v395 = vpack.c.b16 %v352, %v351
    %v396 = vpack.c.b16 %v354, %v353
    %v397 = vpack.c.b16 %v356, %v355
    %v398 = vpack.c.b16 %v358, %v357
    %v399 = vpack.c.b16 %v360, %v359
    %v400 = vpack.c.b16 %v362, %v361
    %v401 = vpack.c.b16 %v364, %v363
    %v402 = vpack.c.b16 %v366, %v365
    %v403 = vpack.c.b16 %v368, %v367
    %v404 = vpack.c.b16 %v370, %v369
    %v405 = vpack.c.b16 %v372, %v371
    %v406 = vpack.c.b16 %v374, %v373
    %439 = vmatprep.subr.bf16.mxu0 0
    %440 = vmatpush1.bf16.msra.mxu0 %v375
    %441 = vmatprep.subr.bf16.mxu0 0
    %442 = vmatpush1.bf16.msra.mxu0 %v376
    %443 = vmatprep.subr.bf16.mxu0 0
    %444 = vmatpush1.bf16.msra.mxu0 %v377
    %445 = vmatprep.subr.bf16.mxu0 0
    %446 = vmatpush1.bf16.msra.mxu0 %v378
    %447 = vmatprep.subr.bf16.mxu0 0
    %448 = vmatpush1.bf16.msra.mxu0 %v379
    %449 = vmatprep.subr.bf16.mxu0 0
    %450 = vmatpush1.bf16.msra.mxu0 %v380
    %451 = vmatprep.subr.bf16.mxu0 0
    %452 = vmatpush1.bf16.msra.mxu0 %v381
    %453 = vmatprep.subr.bf16.mxu0 0
    %454 = vmatpush1.bf16.msra.mxu0 %v382
    %455 = vmatprep.subr.bf16.mxu0 0
    %456 = vmatpush1.bf16.msra.mxu0 %v383
    %457 = vmatprep.subr.bf16.mxu0 0
    %458 = vmatpush1.bf16.msra.mxu0 %v384
    %459 = vmatprep.subr.bf16.mxu0 0
    %460 = vmatpush1.bf16.msra.mxu0 %v385
    %461 = vmatprep.subr.bf16.mxu0 0
    %462 = vmatpush1.bf16.msra.mxu0 %v386
    %463 = vmatprep.subr.bf16.mxu0 0
    %464 = vmatpush1.bf16.msra.mxu0 %v387
    %465 = vmatprep.subr.bf16.mxu0 0
    %466 = vmatpush1.bf16.msra.mxu0 %v388
    %467 = vmatprep.subr.bf16.mxu0 0
    %468 = vmatpush1.bf16.msra.mxu0 %v389
    %469 = vmatprep.subr.bf16.mxu0 0
    %470 = vmatpush1.bf16.msra.mxu0 %v390
    %471 = vmatprep.mubr.bf16.mxu0 %v224
    %472 = vmatmul.mubr.bf16.gmra.mrb[0].mxu0 %v223
    %v473 = vpop.f32.mrb[0].mxu0
    %v474 = vadd.f32 0.0, %v473
    %v475 = vpop.f32.mrb[0].mxu0
    %v476 = vpop.f32.mrb[0].mxu0
    %v477 = vadd.f32 0.0, %v476
    %v478 = vpop.f32.mrb[0].mxu0
    %479 = vmatprep.mubr.bf16.mxu0 %v228
    %480 = vmatmul.mubr.bf16.gmra.mrb[0].mxu0 %v227
    %v481 = vpop.f32.mrb[0].mxu0
    %v482 = vadd.f32 0.0, %v481
    %v483 = vpop.f32.mrb[0].mxu0
    %v484 = vpop.f32.mrb[0].mxu0
    %v485 = vadd.f32 0.0, %v484
    %v486 = vpop.f32.mrb[0].mxu0
    %487 = vmatprep.mubr.bf16.mxu0 %v232
    %488 = vmatmul.mubr.bf16.gmra.mrb[0].mxu0 %v231
    %v489 = vpop.f32.mrb[0].mxu0
    %v490 = vadd.f32 0.0, %v489
    %v491 = vpop.f32.mrb[0].mxu0
    %v492 = vpop.f32.mrb[0].mxu0
    %v493 = vadd.f32 0.0, %v492
    %v494 = vpop.f32.mrb[0].mxu0
    %495 = vdwg.mxu0
    %496 = vmatprep.subr.bf16.mxu0 0
    %497 = vmatpush1.bf16.msra.mxu0 %v391
    %498 = vmatprep.subr.bf16.mxu0 0
    %499 = vmatpush1.bf16.msra.mxu0 %v392
    %500 = vmatprep.subr.bf16.mxu0 0
    %501 = vmatpush1.bf16.msra.mxu0 %v393
    %502 = vmatprep.subr.bf16.mxu0 0
    %503 = vmatpush1.bf16.msra.mxu0 %v394
    %504 = vmatprep.subr.bf16.mxu0 0
    %505 = vmatpush1.bf16.msra.mxu0 %v395
    %506 = vmatprep.subr.bf16.mxu0 0
    %507 = vmatpush1.bf16.msra.mxu0 %v396
    %508 = vmatprep.subr.bf16.mxu0 0
    %509 = vmatpush1.bf16.msra.mxu0 %v397
    %510 = vmatprep.subr.bf16.mxu0 0
    %511 = vmatpush1.bf16.msra.mxu0 %v398
    %512 = vmatprep.subr.bf16.mxu0 0
    %513 = vmatpush1.bf16.msra.mxu0 %v399
    %514 = vmatprep.subr.bf16.mxu0 0
    %515 = vmatpush1.bf16.msra.mxu0 %v400
    %516 = vmatprep.subr.bf16.mxu0 0
    %517 = vmatpush1.bf16.msra.mxu0 %v401
    %518 = vmatprep.subr.bf16.mxu0 0
    %519 = vmatpush1.bf16.msra.mxu0 %v402
    %520 = vmatprep.subr.bf16.mxu0 0
    %521 = vmatpush1.bf16.msra.mxu0 %v403
    %522 = vmatprep.subr.bf16.mxu0 0
    %523 = vmatpush1.bf16.msra.mxu0 %v404
    %524 = vmatprep.subr.bf16.mxu0 0
    %525 = vmatpush1.bf16.msra.mxu0 %v405
    %526 = vmatprep.subr.bf16.mxu0 0
    %527 = vmatpush1.bf16.msra.mxu0 %v406
    %528 = vmatprep.mubr.bf16.mxu0 %v226
    %529 = vmatmul.mubr.bf16.gmra.mrb[0].mxu0 %v225
    %v530 = vpop.f32.mrb[0].mxu0
    %v531 = vadd.f32 %v474, %v530
    %v532 = vpop.f32.mrb[0].mxu0
    %v533 = vpop.f32.mrb[0].mxu0
    %v534 = vadd.f32 %v477, %v533
    %v535 = vpop.f32.mrb[0].mxu0
    %536 = vmatprep.mubr.bf16.mxu0 %v230
    %537 = vmatmul.mubr.bf16.gmra.mrb[0].mxu0 %v229
    %v538 = vpop.f32.mrb[0].mxu0
    %v539 = vadd.f32 %v482, %v538
    %v540 = vpop.f32.mrb[0].mxu0
    %v541 = vpop.f32.mrb[0].mxu0
    %v542 = vadd.f32 %v485, %v541
    %v543 = vpop.f32.mrb[0].mxu0
    %544 = vmatprep.mubr.bf16.mxu0 %v234
    %545 = vmatmul.mubr.bf16.gmra.mrb[0].mxu0 %v233
    %v546 = vpop.f32.mrb[0].mxu0
    %v547 = vadd.f32 %v490, %v546
    %v548 = vpop.f32.mrb[0].mxu0
    %v549 = vpop.f32.mrb[0].mxu0
    %v550 = vadd.f32 %v493, %v549
    %v551 = vpop.f32.mrb[0].mxu0
    %552 = vdwg.mxu0
    %v553 = vmax.f32 %v531, %v547
    %v554 = vmax.f32 %v534, %v550
    %v555 = vmax.f32 %v553, %v554
    %v556 = vmax.f32 %v539, %v542
    %v557 = vmax.f32 %v555, %v556
    %v558 = vld [vmem:[#allocation5] sm:$0xff]
    %v559 = vld [vmem:[#allocation8] sm:$0xf]
    %v560 = vld [vmem:[#allocation8 + $0x4] sm:$0xf]
    %v561 = vld [vmem:[#allocation8 + $0x8] sm:$0xf]
    %v562 = vld [vmem:[#allocation8 + $0xc] sm:$0xf]
    %v563 = vld [vmem:[#allocation8 + $0x10] sm:$0xf]
    %v564 = vld [vmem:[#allocation8 + $0x14] sm:$0xf]
    %v565 = vld [vmem:[#allocation8 + $0x18] sm:$0xf]
    %v566 = vld [vmem:[#allocation8 + $0x1c] sm:$0xf]
    %v567 = vld [vmem:[#allocation8 + $0x20] sm:$0xf]
    %v568 = vld [vmem:[#allocation8 + $0x24] sm:$0xf]
    %v569 = vld [vmem:[#allocation8 + $0x28] sm:$0xf]
    %v570 = vld [vmem:[#allocation8 + $0x2c] sm:$0xf]
    %v571 = vld [vmem:[#allocation8 + $0x30] sm:$0xf]
    %v572 = vld [vmem:[#allocation8 + $0x34] sm:$0xf]
    %v573 = vld [vmem:[#allocation8 + $0x38] sm:$0xf]
    %v574 = vld [vmem:[#allocation8 + $0x3c] sm:$0xf]
    %v575 = vld [vmem:[#allocation8 + $0x40] sm:$0xf]
    %v576 = vld [vmem:[#allocation8 + $0x44] sm:$0xf]
    %v577 = vld [vmem:[#allocation8 + $0x48] sm:$0xf]
    %v578 = vld [vmem:[#allocation8 + $0x4c] sm:$0xf]
    %v579 = vld [vmem:[#allocation8 + $0x50] sm:$0xf]
    %v580 = vld [vmem:[#allocation8 + $0x54] sm:$0xf]
    %v581 = vld [vmem:[#allocation8 + $0x58] sm:$0xf]
    %v582 = vld [vmem:[#allocation8 + $0x5c] sm:$0xf]
    %v583 = vld [vmem:[#allocation8 + $0x60] sm:$0xf]
    %v584 = vld [vmem:[#allocation8 + $0x64] sm:$0xf]
    %v585 = vld [vmem:[#allocation8 + $0x68] sm:$0xf]
    %v586 = vld [vmem:[#allocation8 + $0x6c] sm:$0xf]
    %v587 = vld [vmem:[#allocation8 + $0x70] sm:$0xf]
    %v588 = vld [vmem:[#allocation8 + $0x74] sm:$0xf]
    %v589 = vld [vmem:[#allocation8 + $0x78] sm:$0xf]
    %v590 = vld [vmem:[#allocation8 + $0x7c] sm:$0xf]
    %v591 = vpack.c.bf16 %v557, %v557
    %v592 = vld [vmem:[#allocation10] sm:$0xf]
    %v593 = vld [vmem:[#allocation10 + $0x4] sm:$0xf]
    %v594 = vld [vmem:[#allocation10 + $0x8] sm:$0xf]
    %v595 = vld [vmem:[#allocation10 + $0xc] sm:$0xf]
    %v596 = vld [vmem:[#allocation10 + $0x10] sm:$0xf]
    %v597 = vld [vmem:[#allocation10 + $0x14] sm:$0xf]
    %v598 = vld [vmem:[#allocation10 + $0x18] sm:$0xf]
    %v599 = vld [vmem:[#allocation10 + $0x1c] sm:$0xf]
    %v600 = vld [vmem:[#allocation10 + $0x20] sm:$0xf]
    %v601 = vld [vmem:[#allocation10 + $0x24] sm:$0xf]
    %v602 = vld [vmem:[#allocation10 + $0x28] sm:$0xf]
    %v603 = vld [vmem:[#allocation10 + $0x2c] sm:$0xf]
    %v604 = vld [vmem:[#allocation10 + $0x30] sm:$0xf]
    %v605 = vld [vmem:[#allocation10 + $0x34] sm:$0xf]
    %v606 = vld [vmem:[#allocation10 + $0x38] sm:$0xf]
    %v607 = vld [vmem:[#allocation10 + $0x3c] sm:$0xf]
    %v624 = vunpack.c.l.b16 %v592
    %v625 = vunpack.c.l.b16 %v593
    %v626 = vunpack.c.l.b16 %v594
    %v627 = vunpack.c.l.b16 %v595
    %v628 = vunpack.c.l.b16 %v596
    %v629 = vunpack.c.l.b16 %v597
    %v630 = vunpack.c.l.b16 %v598
    %v631 = vunpack.c.l.b16 %v599
    %v632 = vunpack.c.l.b16 %v600
    %v633 = vunpack.c.l.b16 %v601
    %v634 = vunpack.c.l.b16 %v602
    %v635 = vunpack.c.l.b16 %v603
    %v636 = vunpack.c.l.b16 %v604
    %v637 = vunpack.c.l.b16 %v605
    %v638 = vunpack.c.l.b16 %v606
    %v639 = vunpack.c.l.b16 %v607
    %v640 = vpack.c.b16 %v625, %v624
    %v641 = vpack.c.b16 %v627, %v626
    %v642 = vpack.c.b16 %v629, %v628
    %v643 = vpack.c.b16 %v631, %v630
    %v644 = vpack.c.b16 %v633, %v632
    %v645 = vpack.c.b16 %v635, %v634
    %v646 = vpack.c.b16 %v637, %v636
    %v647 = vpack.c.b16 %v639, %v638
    %656 = vmatprep.subr.bf16.mxu0 0
    %657 = vmatpush1.bf16.msra.mxu0 %v640
    %658 = vmatprep.subr.bf16.mxu0 0
    %659 = vmatpush1.bf16.msra.mxu0 %v641
    %660 = vmatprep.subr.bf16.mxu0 0
    %661 = vmatpush1.bf16.msra.mxu0 %v642
    %662 = vmatprep.subr.bf16.mxu0 0
    %663 = vmatpush1.bf16.msra.mxu0 %v643
    %664 = vmatprep.subr.bf16.mxu0 0
    %665 = vmatpush1.bf16.msra.mxu0 %v644
    %666 = vmatprep.subr.bf16.mxu0 0
    %667 = vmatpush1.bf16.msra.mxu0 %v645
    %668 = vmatprep.subr.bf16.mxu0 0
    %669 = vmatpush1.bf16.msra.mxu0 %v646
    %670 = vmatprep.subr.bf16.mxu0 0
    %671 = vmatpush1.bf16.msra.mxu0 %v647
    %672 = vmatprep.subr.bf16.mxu0 0
    %673 = vmatpush1.bf16.msra.mxu0 0
    %674 = vmatprep.subr.bf16.mxu0 0
    %675 = vmatpush1.bf16.msra.mxu0 0
    %676 = vmatprep.subr.bf16.mxu0 0
    %677 = vmatpush1.bf16.msra.mxu0 0
    %678 = vmatprep.subr.bf16.mxu0 0
    %679 = vmatpush1.bf16.msra.mxu0 0
    %680 = vmatprep.subr.bf16.mxu0 0
    %681 = vmatpush1.bf16.msra.mxu0 0
    %682 = vmatprep.subr.bf16.mxu0 0
    %683 = vmatpush1.bf16.msra.mxu0 0
    %684 = vmatprep.subr.bf16.mxu0 0
    %685 = vmatpush1.bf16.msra.mxu0 0
    %686 = vmatprep.subr.bf16.mxu0 0
    %687 = vmatpush1.bf16.msra.mxu0 0
    %688 = vmatprep.mubr.bf16.mxu0 0
    %689 = vmatmul.mubr.bf16.gmra.mrb[0].mxu0 %v591
    %v690 = vpop.f32.mrb[0].mxu0
    %v691 = vadd.f32 0.0, %v690
    %v692 = vpop.f32.mrb[0].mxu0
    %v693 = vpop.f32.mrb[0].mxu0
    %v694 = vpop.f32.mrb[0].mxu0
    %695 = vdwg.mxu0
    %v697 = vunpack.c.l.b16 %v558
    %v698 = vunpack.c.h.b16 %v558
    %v699 = vpack.c.b16 %v697, %v697
    %v700 = vpack.c.b16 %v698, %v698
    %v735 = vunpack.c.l.b16 %v559
    %v736 = vunpack.c.l.b16 %v560
    %v737 = vunpack.c.l.b16 %v561
    %v738 = vunpack.c.l.b16 %v562
    %v739 = vunpack.c.l.b16 %v563
    %v740 = vunpack.c.l.b16 %v564
    %v741 = vunpack.c.l.b16 %v565
    %v742 = vunpack.c.l.b16 %v566
    %v743 = vunpack.c.l.b16 %v567
    %v744 = vunpack.c.l.b16 %v568
    %v745 = vunpack.c.l.b16 %v569
    %v746 = vunpack.c.l.b16 %v570
    %v747 = vunpack.c.l.b16 %v571
    %v748 = vunpack.c.l.b16 %v572
    %v749 = vunpack.c.l.b16 %v573
    %v750 = vunpack.c.l.b16 %v574
    %v751 = vunpack.c.l.b16 %v575
    %v752 = vunpack.c.l.b16 %v576
    %v753 = vunpack.c.l.b16 %v577
    %v754 = vunpack.c.l.b16 %v578
    %v755 = vunpack.c.l.b16 %v579
    %v756 = vunpack.c.l.b16 %v580
    %v757 = vunpack.c.l.b16 %v581
    %v758 = vunpack.c.l.b16 %v582
    %v759 = vunpack.c.l.b16 %v583
    %v760 = vunpack.c.l.b16 %v584
    %v761 = vunpack.c.l.b16 %v585
    %v762 = vunpack.c.l.b16 %v586
    %v763 = vunpack.c.l.b16 %v587
    %v764 = vunpack.c.l.b16 %v588
    %v765 = vunpack.c.l.b16 %v589
    %v766 = vunpack.c.l.b16 %v590
    %v767 = vpack.c.b16 %v736, %v735
    %v768 = vpack.c.b16 %v738, %v737
    %v769 = vpack.c.b16 %v740, %v739
    %v770 = vpack.c.b16 %v742, %v741
    %v771 = vpack.c.b16 %v744, %v743
    %v772 = vpack.c.b16 %v746, %v745
    %v773 = vpack.c.b16 %v748, %v747
    %v774 = vpack.c.b16 %v750, %v749
    %v775 = vpack.c.b16 %v752, %v751
    %v776 = vpack.c.b16 %v754, %v753
    %v777 = vpack.c.b16 %v756, %v755
    %v778 = vpack.c.b16 %v758, %v757
    %v779 = vpack.c.b16 %v760, %v759
    %v780 = vpack.c.b16 %v762, %v761
    %v781 = vpack.c.b16 %v764, %v763
    %v782 = vpack.c.b16 %v766, %v765
    %799 = vmatprep.subr.bf16.mxu0 0
    %800 = vmatpush1.bf16.msra.mxu0 %v767
    %801 = vmatprep.subr.bf16.mxu0 0
    %802 = vmatpush1.bf16.msra.mxu0 %v768
    %803 = vmatprep.subr.bf16.mxu0 0
    %804 = vmatpush1.bf16.msra.mxu0 %v769
    %805 = vmatprep.subr.bf16.mxu0 0
    %806 = vmatpush1.bf16.msra.mxu0 %v770
    %807 = vmatprep.subr.bf16.mxu0 0
    %808 = vmatpush1.bf16.msra.mxu0 %v771
    %809 = vmatprep.subr.bf16.mxu0 0
    %810 = vmatpush1.bf16.msra.mxu0 %v772
    %811 = vmatprep.subr.bf16.mxu0 0
    %812 = vmatpush1.bf16.msra.mxu0 %v773
    %813 = vmatprep.subr.bf16.mxu0 0
    %814 = vmatpush1.bf16.msra.mxu0 %v774
    %815 = vmatprep.subr.bf16.mxu0 0
    %816 = vmatpush1.bf16.msra.mxu0 %v775
    %817 = vmatprep.subr.bf16.mxu0 0
    %818 = vmatpush1.bf16.msra.mxu0 %v776
    %819 = vmatprep.subr.bf16.mxu0 0
    %820 = vmatpush1.bf16.msra.mxu0 %v777
    %821 = vmatprep.subr.bf16.mxu0 0
    %822 = vmatpush1.bf16.msra.mxu0 %v778
    %823 = vmatprep.subr.bf16.mxu0 0
    %824 = vmatpush1.bf16.msra.mxu0 %v779
    %825 = vmatprep.subr.bf16.mxu0 0
    %826 = vmatpush1.bf16.msra.mxu0 %v780
    %827 = vmatprep.subr.bf16.mxu0 0
    %828 = vmatpush1.bf16.msra.mxu0 %v781
    %829 = vmatprep.subr.bf16.mxu0 0
    %830 = vmatpush1.bf16.msra.mxu0 %v782
    %831 = vmatprep.mubr.bf16.mxu0 %v700
    %832 = vmatmul.mubr.bf16.gmra.mrb[0].mxu0 %v699
    %v833 = vpop.f32.mrb[0].mxu0
    %v834 = vadd.f32 %v691, %v833
    %v835 = vpop.f32.mrb[0].mxu0
    %v836 = vpop.f32.mrb[0].mxu0
    %v837 = vpop.f32.mrb[0].mxu0
    %838 = vdwg.mxu0
    %v839 = vld [vmem:[%s5] sm:$0x1]
    %v841 = vlaneseq
    %v842 = vshrl.u32 %v841, 7
    %v843 = vsub.s32 0, %v842
    %v844 = vrot.slane %v839, %v843
    %v846 = vadd.f32 %v834, %v844
    %v847 = vtanh.pop %v846
    %v848 = vld [vmem:[#allocation11] sm:$0xff]
    %v849 = vld [vmem:[#allocation11 + $0x8] sm:$0xff]
    %v850 = vld [vmem:[#allocation11 + $0x10] sm:$0xff]
    %v851 = vld [vmem:[#allocation11 + $0x18] sm:$0xff]
    %v852 = vld [vmem:[#allocation11 + $0x20] sm:$0xff]
    %v853 = vld [vmem:[#allocation11 + $0x28] sm:$0xff]
    %v854 = vld [vmem:[#allocation11 + $0x30] sm:$0xff]
    %v855 = vld [vmem:[#allocation11 + $0x38] sm:$0xff]
    %v856 = vld [vmem:[#allocation11 + $0x40] sm:$0xff]
    %v857 = vld [vmem:[#allocation11 + $0x48] sm:$0xff]
    %v858 = vld [vmem:[#allocation11 + $0x50] sm:$0xff]
    %v859 = vld [vmem:[#allocation11 + $0x58] sm:$0xff]
    %v860 = vld [vmem:[#allocation11 + $0x60] sm:$0xff]
    %v861 = vld [vmem:[#allocation11 + $0x68] sm:$0xff]
    %v862 = vld [vmem:[#allocation11 + $0x70] sm:$0xff]
    %v863 = vld [vmem:[#allocation11 + $0x78] sm:$0xff]
    %v864 = vld [vmem:[%s7] sm:$0x1]
    %v866 = vlaneseq
    %v867 = vshrl.u32 %v866, 7
    %v868 = vsub.s32 0, %v867
    %v869 = vrot.slane %v864, %v868
    %871 = vmatprep.subr.mxu0 0.0
    %872 = vmatpush1.msra.mxu0 %v848
    %873 = vmatprep.subr.mxu0 0.0
    %874 = vmatpush1.msra.mxu0 %v849
    %875 = vmatprep.subr.mxu0 0.0
    %876 = vmatpush1.msra.mxu0 %v850
    %877 = vmatprep.subr.mxu0 0.0
    %878 = vmatpush1.msra.mxu0 %v851
    %879 = vmatprep.subr.mxu0 0.0
    %880 = vmatpush1.msra.mxu0 %v852
    %881 = vmatprep.subr.mxu0 0.0
    %882 = vmatpush1.msra.mxu0 %v853
    %883 = vmatprep.subr.mxu0 0.0
    %884 = vmatpush1.msra.mxu0 %v854
    %885 = vmatprep.subr.mxu0 0.0
    %886 = vmatpush1.msra.mxu0 %v855
    %887 = vmatprep.subr.mxu0 0.0
    %888 = vmatpush1.msra.mxu0 %v856
    %889 = vmatprep.subr.mxu0 0.0
    %890 = vmatpush1.msra.mxu0 %v857
    %891 = vmatprep.subr.mxu0 0.0
    %892 = vmatpush1.msra.mxu0 %v858
    %893 = vmatprep.subr.mxu0 0.0
    %894 = vmatpush1.msra.mxu0 %v859
    %895 = vmatprep.subr.mxu0 0.0
    %896 = vmatpush1.msra.mxu0 %v860
    %897 = vmatprep.subr.mxu0 0.0
    %898 = vmatpush1.msra.mxu0 %v861
    %899 = vmatprep.subr.mxu0 0.0
    %900 = vmatpush1.msra.mxu0 %v862
    %901 = vmatprep.subr.mxu0 0.0
    %902 = vmatpush1.msra.mxu0 %v863
    %903 = vmatprep.subr.mxu0 0.0
    %904 = vmatpush1.msra.mxu0 0.0
    %905 = vmatprep.subr.mxu0 0.0
    %906 = vmatpush1.msra.mxu0 0.0
    %907 = vmatprep.subr.mxu0 0.0
    %908 = vmatpush1.msra.mxu0 0.0
    %909 = vmatprep.subr.mxu0 0.0
    %910 = vmatpush1.msra.mxu0 0.0
    %911 = vmatprep.subr.mxu0 0.0
    %912 = vmatpush1.msra.mxu0 0.0
    %913 = vmatprep.subr.mxu0 0.0
    %914 = vmatpush1.msra.mxu0 0.0
    %915 = vmatprep.subr.mxu0 0.0
    %916 = vmatpush1.msra.mxu0 0.0
    %917 = vmatprep.subr.mxu0 0.0
    %918 = vmatpush1.msra.mxu0 0.0
    %919 = vmatprep.subr.mxu0 0.0
    %920 = vmatpush1.msra.mxu0 0.0
    %921 = vmatprep.subr.mxu0 0.0
    %922 = vmatpush1.msra.mxu0 0.0
    %923 = vmatprep.subr.mxu0 0.0
    %924 = vmatpush1.msra.mxu0 0.0
    %925 = vmatprep.subr.mxu0 0.0
    %926 = vmatpush1.msra.mxu0 0.0
    %927 = vmatprep.subr.mxu0 0.0
    %928 = vmatpush1.msra.mxu0 0.0
    %929 = vmatprep.subr.mxu0 0.0
    %930 = vmatpush1.msra.mxu0 0.0
    %931 = vmatprep.subr.mxu0 0.0
    %932 = vmatpush1.msra.mxu0 0.0
    %933 = vmatprep.subr.mxu0 0.0
    %934 = vmatpush1.msra.mxu0 0.0
    %935 = vmatprep.mubr.f32.mxu0 0.0
    %936 = vmatmul.mubr.f32.gmra.mrb[0].mxu0 %v847
    %v937 = vpop.f32.mrb[0].mxu0
    %v938 = vadd.f32 %v869, %v937
    %v939 = vpop.f32.mrb[0].mxu0
    %940 = vdwg.mxu0
    %941 = vst [vmem:[#allocation13] sm:$0xff] %v938
    // Predicated region
    $region58: #{tpu_custom_call.1} parent=1 // pred_check
      _
    $region59: #{tpu_custom_call.1} parent=1 // pred_check_branch
      %943 = sbr.rel (0) target = $region61
    $region60: #{tpu_custom_call.1} parent=1 // pred_region
      %s945 = ssub.s32 128, 128
      %946 = vsyncadd [#allocation4], %s945
      %s948 = sshll.u32 [#allocation13], 4
      %s949 = int_to_ptr.vmem [resolvable:$true] %s948
      %951 = dma.vmem_to_hbm [thread:$0]  %s949, 128, %s8, [#allocation4]
    $region61: #{tpu_custom_call.1} parent=1 // pred_fallthru
      _
    // Predicated region
    $region62: #{tpu_custom_call.1} parent=1 // pred_check
      _
    $region63: #{tpu_custom_call.1} parent=1 // pred_check_branch
      %953 = sbr.rel (0) target = $region65
    $region64: #{tpu_custom_call.1} parent=1 // pred_region
      %954 = dma.done [#allocation4], 128
    $region65: #{tpu_custom_call.1} parent=1 // pred_fallthru
      _
    %955 = vsyncpa [#allocation3], 1
    %956 = vsyncpa [#allocation6], 1
    %957 = vsyncpa [#allocation9], 1
    %958 = vsyncpa [#allocation12], 1
    %959 = vsyncpa [#allocation4], 1

</llo_original>
